<compile_context>
chip_gen: v5e
topology: v5e:2x2
jax: 0.10.0
libtpu: 0.0.40
codegen_flags: <defaults>
</compile_context>

<pallas_src>
import functools

import jax
import jax.numpy as jnp
from jax.experimental import pallas as pl
from jax.experimental.pallas import tpu as pltpu


def _decinit_kernel(x_ref, w_ref, b_ref, o_ref):
    # x: [Bt, Kp], w: [Kp, Np], b: [1, Np] -> o: [Bt, Np]
    y = jnp.dot(x_ref[...], w_ref[...], preferred_element_type=jnp.float32)
    y = y + b_ref[...]                              # broadcast bias over batch (VPU)
    o_ref[...] = jnp.tanh(y).astype(o_ref.dtype)    # transcendental -> EUP slot


def _round_up(n, m):
    return ((n + m - 1) // m) * m


@functools.partial(jax.jit, static_argnames=("block_b",))
def dec_init_forward(x, w_t, b, *, block_b=256):
    """out = tanh(x @ w_t + b).

    x:   [B, H_in]      float32
    w_t: [H_in, H_dec]  float32 (transposed from PyTorch's [out, in] layout)
    b:   [H_dec]        float32
    returns [B, H_dec]  float32
    """
    B, H_in = x.shape
    H_dec = w_t.shape[1]

    # Pad to TPU-friendly shapes: sublane multiple of 8, lane multiple of 128.
    Bp = _round_up(max(B, 8), 8)
    Kp = _round_up(H_in, 128)
    Np = _round_up(H_dec, 128)

    xp = jnp.pad(x, ((0, Bp - B), (0, Kp - H_in))) if (Bp != B or Kp != H_in) else x
    wp = (jnp.pad(w_t, ((0, Kp - H_in), (0, Np - H_dec)))
          if (Kp != H_in or Np != H_dec) else w_t)
    bp = jnp.pad(b, (0, Np - H_dec)) if Np != H_dec else b
    bp = bp.reshape(1, Np)

    vmem = pltpu.MemorySpace.VMEM

    if Bp <= block_b:
        # Single block: everything resident in VMEM, no grid / pipeline overhead.
        out = pl.pallas_call(
            _decinit_kernel,
            out_shape=jax.ShapeDtypeStruct((Bp, Np), jnp.float32),
            in_specs=[pl.BlockSpec(memory_space=vmem)] * 3,
            out_specs=pl.BlockSpec(memory_space=vmem),
        )(xp, wp, bp)
    else:
        # Tile only the batch axis; weights/bias are whole per block.
        Bt = _round_up(Bp, block_b)
        if Bt != Bp:
            xp = jnp.pad(xp, ((0, Bt - Bp), (0, 0)))
        out = pl.pallas_call(
            _decinit_kernel,
            out_shape=jax.ShapeDtypeStruct((Bt, Np), jnp.float32),
            grid=(Bt // block_b,),
            in_specs=[
                pl.BlockSpec((block_b, Kp), lambda i: (i, 0)),
                pl.BlockSpec((Kp, Np), lambda i: (0, 0)),
                pl.BlockSpec((1, Np), lambda i: (0, 0)),
            ],
            out_specs=pl.BlockSpec((block_b, Np), lambda i: (i, 0)),
            compiler_params=pltpu.CompilerParams(
                dimension_semantics=("parallel",),
            ),
        )(xp, wp, bp)

    return out[:B, :H_dec]


if __name__ == "__main__":
    # Module config (consistent with DecInit semantics, small but lane-aligned):
    #   brnn=True -> num_directions=2, enc_rnn_size=256 -> initer input = 128
    #   dec_rnn_size=128
    batch = 8
    enc_rnn_size = 256
    num_directions = 2
    in_features = enc_rnn_size // num_directions   # 128
    dec_rnn_size = 128

    key = jax.random.PRNGKey(0)
    kx, kw, kb, kx2 = jax.random.split(key, 4)

    # nn.Linear-style uniform init, PyTorch weight layout [out, in].
    bound = 1.0 / (in_features ** 0.5)
    w = jax.random.uniform(kw, (dec_rnn_size, in_features),
                           minval=-bound, maxval=bound, dtype=jnp.float32)
    b = jax.random.uniform(kb, (dec_rnn_size,),
                           minval=-bound, maxval=bound, dtype=jnp.float32)

    # Input: last encoder hidden state [B, enc_rnn_size // num_directions]
    x = jax.random.normal(kx, (batch, in_features), dtype=jnp.float32)

    # --- single-block path ---
    out = dec_init_forward(x, w.T, b)
    out = jax.block_until_ready(out)
    ref = jnp.tanh(x @ w.T + b)
    assert out.shape == (batch, dec_rnn_size)
    assert jnp.allclose(out, ref, atol=1e-5, rtol=1e-5)

    # --- batch-tiled ("parallel") path, exercised at a larger batch ---
    big_batch = 1024
    x2 = jax.random.normal(kx2, (big_batch, in_features), dtype=jnp.float32)
    out2 = jax.block_until_ready(dec_init_forward(x2, w.T, b))
    ref2 = jnp.tanh(x2 @ w.T + b)
    assert out2.shape == (big_batch, dec_rnn_size)
    assert jnp.allclose(out2, ref2, atol=1e-5, rtol=1e-5)

    print("KERNEL_OK")
</pallas_src>

<mosaic_0001>
module attributes {stable_mosaic.version = 11 : i64} {
  func.func @_decinit_kernel(%arg0: memref<8x128xf32, #tpu.memory_space<vmem>>, %arg1: memref<128x128xf32, #tpu.memory_space<vmem>>, %arg2: memref<1x128xf32, #tpu.memory_space<vmem>>, %arg3: memref<8x128xf32, #tpu.memory_space<vmem>>) attributes {dimension_semantics = [], scalar_prefetch = 0 : i64, scratch_operands = 0 : i64, tpu.core_type = #tpu.core_type<tc>} {
    %c0 = arith.constant 0 : index
    %c0_0 = arith.constant 0 : index
    %0 = vector.load %arg0[%c0, %c0_0] : memref<8x128xf32, #tpu.memory_space<vmem>>, vector<8x128xf32>
    %c0_1 = arith.constant 0 : index
    %c0_2 = arith.constant 0 : index
    %1 = vector.load %arg1[%c0_1, %c0_2] : memref<128x128xf32, #tpu.memory_space<vmem>>, vector<128x128xf32>
    %cst = arith.constant dense<0.000000e+00> : vector<8x128xf32>
    %2 = tpu.matmul %0, %1, %cst {dimension_numbers = #tpu.dot_dimension_numbers<[1], [0], [0], [1], [0, 0, 1, 1], [], []>} : vector<8x128xf32>, vector<128x128xf32>, vector<8x128xf32> -> vector<8x128xf32>
    %c0_3 = arith.constant 0 : index
    %c0_4 = arith.constant 0 : index
    %3 = vector.load %arg2[%c0_3, %c0_4] : memref<1x128xf32, #tpu.memory_space<vmem>>, vector<1x128xf32>
    %4 = vector.broadcast %3 : vector<1x128xf32> to vector<8x128xf32>
    %5 = arith.addf %2, %4 : vector<8x128xf32>
    %6 = math.tanh %5 : vector<8x128xf32>
    %c0_5 = arith.constant 0 : index
    %c0_6 = arith.constant 0 : index
    %7 = vector.load %arg3[%c0_5, %c0_6] : memref<8x128xf32, #tpu.memory_space<vmem>>, vector<8x128xf32>
    tpu.vector_store %arg3[%c0_5, %c0_6], %6 {strides = array<i32>} : memref<8x128xf32, #tpu.memory_space<vmem>>, vector<8x128xf32>,
    return
  }
}

</mosaic_0001>

<llo_original>
// kernel: dec_init_forward.1
$region0: #{dec_init_forward.1}
  #allocation0 [shape = 'u32[]', space=smem, size = 0x4, offset = 0x4, fixed_abs, tag = 'smem constant byte address 0x4 - core index']
  #allocation1 [shape = 'u32[72,128]{1,0:T(1,128)}', space=vmem, size = 0x9000, scoped, tag = 'internal scratch']
  %s0 = inlined_call_operand.hbm [shape: f32[8,128], index: 0, kind: input, shape index: {}]
  %s1 = inlined_call_operand.hbm [shape: f32[128,128], index: 1, kind: input, shape index: {}]
  %s2 = inlined_call_operand.vmem [shape: f32[1,128], index: 2, kind: input, shape index: {}]
  %s3 = inlined_call_operand.hbm [shape: f32[8,128], index: 3, kind: output, shape index: {}]
  %s4 = sld [smem:[#allocation0]]
  $region30: #{dec_init_forward.1} parent=0
    _
  %s6 = ssub.s32 1, %s4
  %s7 = scalar_select 0, %s6, %s4
  $region1: #{dec_init_forward.1} parent=0
    #allocation2 [shape = 'u8[4096]{0}', space=vmem, size = 0x1000, scoped, tag = 'input window, operand 0, single buffered']
    #allocation3 [shape = 's32[1]{0}', space=sflag, size = 0x4, scoped, tag = 'scoped memory for dec_init_forward.1']
    #allocation4 [shape = 's32[1]{0}', space=sflag, size = 0x4, scoped, tag = 'scoped memory for dec_init_forward.1']
    #allocation5 [shape = 'u8[65536]{0}', space=vmem, size = 0x10000, scoped, tag = 'input window, operand 1, single buffered']
    #allocation6 [shape = 's32[1]{0}', space=sflag, size = 0x4, scoped, tag = 'scoped memory for dec_init_forward.1']
    #allocation7 [shape = 'u8[4096]{0}', space=vmem, size = 0x1000, scoped, tag = 'output window, operand 0, single buffered']
    %8 = vsyncpa [#allocation3], 0
    %9 = vsyncpa [#allocation6], 0
    %10 = vsyncpa [#allocation4], 0
    // Predicated region
    $region2: #{dec_init_forward.1} parent=1 // pred_check
      _
    $region3: #{dec_init_forward.1} parent=1 // pred_check_branch
      %12 = sbr.rel (0) target = $region5
    $region4: #{dec_init_forward.1} parent=1 // pred_region
      %14 = vsyncadd [#allocation3], 0
      %s16 = sshll.u32 %s0, 4
      %s17 = int_to_ptr.hbm [resolvable:$true] %s16
      %s18 = sshll.u32 [#allocation2], 4
      %s19 = int_to_ptr.vmem [resolvable:$true] %s18
      %21 = dma.hbm_to_vmem [thread:$0]  %s17, 128, %s19, [#allocation3]
    $region5: #{dec_init_forward.1} parent=1 // pred_fallthru
      _
    // Predicated region
    $region6: #{dec_init_forward.1} parent=1 // pred_check
      _
    $region7: #{dec_init_forward.1} parent=1 // pred_check_branch
      %23 = sbr.rel (0) target = $region9
    $region8: #{dec_init_forward.1} parent=1 // pred_region
      %25 = vsyncadd [#allocation6], 0
      %s26 = sshll.u32 %s1, 4
      %s27 = int_to_ptr.hbm [resolvable:$true] %s26
      %s28 = sshll.u32 [#allocation5], 4
      %s29 = int_to_ptr.vmem [resolvable:$true] %s28
      %34 = dma.hbm_to_vmem [thread:$0]  %s27, 2048, %s29, [#allocation6], 128, 128, 8
    $region9: #{dec_init_forward.1} parent=1 // pred_fallthru
      _
    // Predicated region
    $region10: #{dec_init_forward.1} parent=1 // pred_check
      _
    $region11: #{dec_init_forward.1} parent=1 // pred_check_branch
      %36 = sbr.rel (0) target = $region13
    $region12: #{dec_init_forward.1} parent=1 // pred_region
      _
    $region13: #{dec_init_forward.1} parent=1 // pred_fallthru
      _
    // Predicated region
    $region14: #{dec_init_forward.1} parent=1 // pred_check
      _
    $region15: #{dec_init_forward.1} parent=1 // pred_check_branch
      %38 = sbr.rel (0) target = $region17
    $region16: #{dec_init_forward.1} parent=1 // pred_region
      %40 = dma.done [#allocation3], 128
    $region17: #{dec_init_forward.1} parent=1 // pred_fallthru
      _
    // Predicated region
    $region18: #{dec_init_forward.1} parent=1 // pred_check
      _
    $region19: #{dec_init_forward.1} parent=1 // pred_check_branch
      %42 = sbr.rel (0) target = $region21
    $region20: #{dec_init_forward.1} parent=1 // pred_region
      %44 = dma.done [#allocation6], 2048
    $region21: #{dec_init_forward.1} parent=1 // pred_fallthru
      _
    %v45 = vld [vmem:[#allocation2] sm:$0xff]
    %v46 = vld [vmem:[#allocation5] sm:$0xff]
    %v47 = vld [vmem:[#allocation5 + $0x8] sm:$0xff]
    %v48 = vld [vmem:[#allocation5 + $0x10] sm:$0xff]
    %v49 = vld [vmem:[#allocation5 + $0x18] sm:$0xff]
    %v50 = vld [vmem:[#allocation5 + $0x20] sm:$0xff]
    %v51 = vld [vmem:[#allocation5 + $0x28] sm:$0xff]
    %v52 = vld [vmem:[#allocation5 + $0x30] sm:$0xff]
    %v53 = vld [vmem:[#allocation5 + $0x38] sm:$0xff]
    %v54 = vld [vmem:[#allocation5 + $0x40] sm:$0xff]
    %v55 = vld [vmem:[#allocation5 + $0x48] sm:$0xff]
    %v56 = vld [vmem:[#allocation5 + $0x50] sm:$0xff]
    %v57 = vld [vmem:[#allocation5 + $0x58] sm:$0xff]
    %v58 = vld [vmem:[#allocation5 + $0x60] sm:$0xff]
    %v59 = vld [vmem:[#allocation5 + $0x68] sm:$0xff]
    %v60 = vld [vmem:[#allocation5 + $0x70] sm:$0xff]
    %v61 = vld [vmem:[#allocation5 + $0x78] sm:$0xff]
    %v62 = vld [vmem:[%s2] sm:$0x1]
    %v64 = vperm.slane %v62, 0
    %66 = vmatpush.msra.mxu0 %v61
    %67 = vmatpush.msra.mxu0 %v60
    %68 = vmatpush.msra.mxu0 %v59
    %69 = vmatpush.msra.mxu0 %v58
    %70 = vmatpush.msra.mxu0 %v57
    %71 = vmatpush.msra.mxu0 %v56
    %72 = vmatpush.msra.mxu0 %v55
    %73 = vmatpush.msra.mxu0 %v54
    %74 = vmatpush.msra.mxu0 %v53
    %75 = vmatpush.msra.mxu0 %v52
    %76 = vmatpush.msra.mxu0 %v51
    %77 = vmatpush.msra.mxu0 %v50
    %78 = vmatpush.msra.mxu0 %v49
    %79 = vmatpush.msra.mxu0 %v48
    %80 = vmatpush.msra.mxu0 %v47
    %81 = vmatpush.msra.mxu0 %v46
    %82 = vmatmul.f32.gmra.mxu0 %v45
    %v83 = vpop.f32.mrf.mxu0
    %v84 = vadd.f32 %v64, %v83
    %85 = vdwg.mxu0
    %v86 = vtanh.pop %v84
    %87 = vst [vmem:[#allocation7] sm:$0xff] %v86
    // Predicated region
    $region22: #{dec_init_forward.1} parent=1 // pred_check
      _
    $region23: #{dec_init_forward.1} parent=1 // pred_check_branch
      %89 = sbr.rel (0) target = $region25
    $region24: #{dec_init_forward.1} parent=1 // pred_region
      %91 = vsyncadd [#allocation4], 0
      %s93 = sshll.u32 [#allocation7], 4
      %s94 = int_to_ptr.vmem [resolvable:$true] %s93
      %s95 = sshll.u32 %s3, 4
      %s96 = int_to_ptr.hbm [resolvable:$true] %s95
      %98 = dma.vmem_to_hbm [thread:$0]  %s94, 128, %s96, [#allocation4]
    $region25: #{dec_init_forward.1} parent=1 // pred_fallthru
      _
    // Predicated region
    $region26: #{dec_init_forward.1} parent=1 // pred_check
      _
    $region27: #{dec_init_forward.1} parent=1 // pred_check_branch
      %100 = sbr.rel (0) target = $region29
    $region28: #{dec_init_forward.1} parent=1 // pred_region
      %102 = dma.done [#allocation4], 128
    $region29: #{dec_init_forward.1} parent=1 // pred_fallthru
      _
    %103 = vsyncpa [#allocation3], 1
    %104 = vsyncpa [#allocation6], 1
    %105 = vsyncpa [#allocation4], 1

</llo_original>
